<compile_context>
chip_gen: v7x
topology: tpu7x:2x2x1
jax: 0.10.0
libtpu: 0.0.40
codegen_flags: <defaults>
</compile_context>

<pallas_src>
import functools

import jax
import jax.numpy as jnp
import numpy as np
from jax.experimental import pallas as pl
from jax.experimental.pallas import tpu as pltpu


def _round_up(v, m):
    return ((v + m - 1) // m) * m


# ---------------------------------------------------------------------------
# Fused kernel: scores + group-masked softmax + w@x + membership-mean
# ---------------------------------------------------------------------------
def _fused_attn_kernel(bidx_q_ref, bidx_k_ref, x_ref, mem_ref, out_ref, *,
                       scale, block_q):
    q = pl.program_id(0)

    @pl.when(q == 0)
    def _init():
        out_ref[...] = jnp.zeros_like(out_ref)

    # Query rows for this block are sliced from the (grid-constant) full x
    # block, so x is DMA'd into VMEM only once.
    row0 = pl.multiple_of(q * block_q, block_q)
    xq = x_ref[pl.ds(row0, block_q), :]              # (block_q, D)  mxu dtype
    xk = x_ref[...]                                  # (N, D)        mxu dtype

    # Scores: contract on the last dim of both operands (no explicit x.T).
    s = jax.lax.dot_general(
        xq, xk,
        dimension_numbers=(((1,), (1,)), ((), ())),
        preferred_element_type=jnp.float32,
    ) * jnp.float32(scale)                           # (block_q, N) f32

    # Group membership mask: (block_q, 1) == (1, N) -> (block_q, N).
    mask = bidx_q_ref[...] == bidx_k_ref[...]

    # Masked softmax with minimal live (block_q, N) intermediates.
    neg = jnp.float32(-1e30)
    m = jnp.max(jnp.where(mask, s, neg), axis=-1, keepdims=True)
    p = jnp.where(mask, jnp.exp(s - m), jnp.float32(0.0))
    denom = jnp.sum(p, axis=-1, keepdims=True)
    w = p * pl.reciprocal(denom, approx=True)        # (block_q, N), EUP vrcp

    # y = w @ x  (dense MXU matmul, f32 accumulate)
    y = jnp.dot(w.astype(xk.dtype), xk,
                preferred_element_type=jnp.float32)  # (block_q, D)

    # out += Mem_scaled[:, q_block] @ y   (1/count already folded into Mem)
    out_ref[...] += jnp.dot(mem_ref[...], y,
                            preferred_element_type=jnp.float32)


# ---------------------------------------------------------------------------
# Wrapper
# ---------------------------------------------------------------------------
def scaled_dot_product_attention(x, batch_index, rep_ids, *,
                                 mxu_dtype=jnp.float32, block_q=None):
    """x: (N, D) float; batch_index: (N,) int32; rep_ids: (R,) int32 unique ids."""
    x = jnp.asarray(x, jnp.float32)
    batch_index = jnp.asarray(batch_index, jnp.int32)
    rep_ids = jnp.asarray(rep_ids, jnp.int32)

    N, D = x.shape
    R = rep_ids.shape[0]
    scale = float(1.0 / np.sqrt(np.float32(D)))      # rsqrt(input_dim), unpadded D

    # TPU-friendly padding: lanes -> mult of 128, sublanes -> mult of 8.
    d_pad = _round_up(D, 128)
    r_pad = _round_up(R, 8)
    n8 = _round_up(N, 8)

    # Query-block size.  The membership block's lane dim is block_q, so it must
    # be a multiple of 128 or equal to n_pad.
    if block_q is None:
        block_q = n8 if n8 <= 1024 else 512
    if block_q >= n8:
        block_q = n8
        n_pad = n8
    else:
        block_q = _round_up(max(block_q, 128), 128)
        n_pad = _round_up(n8, block_q)
        if block_q >= n_pad:
            block_q = n_pad
    num_q_blocks = n_pad // block_q

    # Padded rows carry a sentinel batch id: they only match other padded rows,
    # never join a real repertoire, and their x rows are zero.
    sentinel = jnp.int32(np.iinfo(np.int32).min)
    bidx_q = jnp.full((n_pad, 1), sentinel, jnp.int32).at[:N, 0].set(batch_index)
    bidx_k = jnp.full((1, n_pad), sentinel, jnp.int32).at[0, :N].set(batch_index)

    # Cast x to the MXU operand dtype in the wrapper (halves DMA for bf16).
    x_p = jnp.zeros((n_pad, d_pad), jnp.float32).at[:N, :D].set(x).astype(mxu_dtype)

    # Membership matrix with 1/count folded in -> out = Mem_scaled @ (w @ x).
    mem = (rep_ids[:, None] == batch_index[None, :]).astype(jnp.float32)   # (R, N)
    counts = jnp.maximum(jnp.sum(mem, axis=1, keepdims=True), jnp.float32(1.0))
    mem_p = jnp.zeros((r_pad, n_pad), jnp.float32).at[:R, :N].set(mem / counts)

    itemsize = jnp.dtype(mxu_dtype).itemsize
    # Working-set estimate: x (double-buffered constant block), ~3 live
    # (block_q, N) f32 intermediates, mem block (double-buffered), out, y, bidx.
    need = (2 * n_pad * d_pad * itemsize
            + 3 * block_q * n_pad * 4
            + 2 * r_pad * block_q * 4
            + r_pad * d_pad * 4
            + block_q * d_pad * 4
            + 2 * n_pad * 4)
    vmem_bytes = int(min(max(int(need * 1.25) + (2 << 20), 16 << 20), 48 << 20))

    cost = pl.CostEstimate(
        flops=4 * n_pad * n_pad * d_pad + 2 * r_pad * n_pad * d_pad,
        transcendentals=n_pad * n_pad + n_pad,
        bytes_accessed=(n_pad * d_pad * itemsize + 2 * n_pad * 4
                        + r_pad * n_pad * 4 + r_pad * d_pad * 4),
    )

    out = pl.pallas_call(
        functools.partial(_fused_attn_kernel, scale=scale, block_q=block_q),
        out_shape=jax.ShapeDtypeStruct((r_pad, d_pad), jnp.float32),
        grid=(num_q_blocks,),
        in_specs=[
            pl.BlockSpec((block_q, 1), lambda q: (q, 0)),       # query batch ids
            pl.BlockSpec((1, n_pad), lambda q: (0, 0)),          # key batch ids
            pl.BlockSpec((n_pad, d_pad), lambda q: (0, 0)),      # x (constant block)
            pl.BlockSpec((r_pad, block_q), lambda q: (0, q)),    # Mem_scaled cols
        ],
        out_specs=pl.BlockSpec((r_pad, d_pad), lambda q: (0, 0)),
        compiler_params=pltpu.CompilerParams(
            dimension_semantics=("arbitrary",),   # query axis is a reduction into out
            vmem_limit_bytes=vmem_bytes,
        ),
        cost_estimate=cost,
    )(bidx_q, bidx_k, x_p, mem_p)

    return out[:R, :D]


# ---------------------------------------------------------------------------
# Pure-numpy reference (mirrors the PyTorch forward exactly)
# ---------------------------------------------------------------------------
def _reference(x, batch_index, rep_ids):
    x = np.asarray(x, dtype=np.float32)
    bidx = np.asarray(batch_index)
    scale = 1.0 / np.sqrt(np.float32(x.shape[1]))
    outs = []
    for rep in np.asarray(rep_ids):
        xr = x[bidx == rep]                                  # (n_r, D)
        s = xr @ xr.T * scale
        s = s - s.max(axis=-1, keepdims=True)
        w = np.exp(s)
        w = w / w.sum(axis=-1, keepdims=True)
        outs.append((w @ xr).mean(axis=0))
    return np.stack(outs, axis=0)


if __name__ == "__main__":
    # --- small test (single query block) ---
    key = jax.random.PRNGKey(0)
    N, D = 16, 32
    x = jax.random.normal(key, (N, D), dtype=jnp.float32)
    batch_index = jnp.array([0] * 5 + [1] * 6 + [2] * 5, dtype=jnp.int32)
    rep_ids = jnp.array(np.unique(np.asarray(batch_index)), dtype=jnp.int32)
    ref = _reference(x, batch_index, rep_ids)

    out_f32 = jax.block_until_ready(
        scaled_dot_product_attention(x, batch_index, rep_ids,
                                     mxu_dtype=jnp.float32))
    np.testing.assert_allclose(np.asarray(out_f32), ref, rtol=1e-2, atol=1e-2)

    out_bf16 = jax.block_until_ready(
        scaled_dot_product_attention(x, batch_index, rep_ids,
                                     mxu_dtype=jnp.bfloat16))
    np.testing.assert_allclose(np.asarray(out_bf16), ref, rtol=6e-2, atol=6e-2)

    # --- larger test exercising the query-tiled (multi-grid-step) path ---
    N2, D2 = 300, 40
    x2 = jax.random.normal(jax.random.PRNGKey(1), (N2, D2), dtype=jnp.float32)
    batch_index2 = jax.random.randint(jax.random.PRNGKey(2), (N2,), 0, 4).astype(jnp.int32)
    rep_ids2 = jnp.array(np.unique(np.asarray(batch_index2)), dtype=jnp.int32)
    ref2 = _reference(x2, batch_index2, rep_ids2)

    out2 = jax.block_until_ready(
        scaled_dot_product_attention(x2, batch_index2, rep_ids2,
                                     mxu_dtype=jnp.float32, block_q=128))
    np.testing.assert_allclose(np.asarray(out2), ref2, rtol=1e-2, atol=1e-2)

    print("KERNEL_OK")
</pallas_src>

<mosaic_0001>
module attributes {stable_mosaic.version = 11 : i64} {
  func.func @_fused_attn_kernel(%arg0: i32, %arg1: memref<16x1xi32, #tpu.memory_space<vmem>>, %arg2: memref<1x16xi32, #tpu.memory_space<vmem>>, %arg3: memref<16x128xf32, #tpu.memory_space<vmem>>, %arg4: memref<8x16xf32, #tpu.memory_space<vmem>>, %arg5: memref<8x128xf32, #tpu.memory_space<vmem>>) attributes {dimension_semantics = [#tpu.dimension_semantics<arbitrary>], iteration_bounds = array<i64: 1>, scalar_prefetch = 0 : i64, scratch_operands = 0 : i64, tpu.core_type = #tpu.core_type<tc>, window_params = [{transform_indices = @transform_0, window_bounds = array<i64: 16, 1>}, {pipeline_mode = #tpu.pipeline_mode<synchronous>, transform_indices = @transform_1, window_bounds = array<i64: 1, 16>}, {pipeline_mode = #tpu.pipeline_mode<synchronous>, transform_indices = @transform_2, window_bounds = array<i64: 16, 128>}, {transform_indices = @transform_3, window_bounds = array<i64: 8, 16>}, {pipeline_mode = #tpu.pipeline_mode<synchronous>, transform_indices = @transform_4, window_bounds = array<i64: 8, 128>}]} {
    %c0_i32 = arith.constant 0 : i32
    %0 = arith.cmpi eq, %arg0, %c0_i32 : i32
    %1 = arith.extui %0 : i1 to i32
    %c0_i32_0 = arith.constant 0 : i32
    %2 = arith.cmpi ne, %1, %c0_i32_0 : i32
    scf.if %2 {
      %cst_20 = arith.constant 0.000000e+00 : f32
      %36 = vector.broadcast %cst_20 : f32 to vector<8x128xf32>
      %c0_21 = arith.constant 0 : index
      %c0_22 = arith.constant 0 : index
      %37 = vector.load %arg5[%c0_21, %c0_22] : memref<8x128xf32, #tpu.memory_space<vmem>>, vector<8x128xf32>
      tpu.vector_store %arg5[%c0_21, %c0_22], %36 {strides = array<i32>} : memref<8x128xf32, #tpu.memory_space<vmem>>, vector<8x128xf32>,
    } else {
    }
    %c16_i32 = arith.constant 16 : i32
    %3 = arith.muli %arg0, %c16_i32 : i32
    %4 = tpu.assume_multiple %3, 16 : i32
    %5 = arith.index_cast %4 : i32 to index
    %c0 = arith.constant 0 : index
    %6 = vector.load %arg3[%5, %c0] : memref<16x128xf32, #tpu.memory_space<vmem>>, vector<16x128xf32>
    %c0_1 = arith.constant 0 : index
    %c0_2 = arith.constant 0 : index
    %7 = vector.load %arg3[%c0_1, %c0_2] : memref<16x128xf32, #tpu.memory_space<vmem>>, vector<16x128xf32>
    %cst = arith.constant dense<0.000000e+00> : vector<16x16xf32>
    %8 = tpu.matmul %6, %7, %cst {dimension_numbers = #tpu.dot_dimension_numbers<[1], [1], [0], [0], [0, 0, 1, 0], [], []>} : vector<16x128xf32>, vector<16x128xf32>, vector<16x16xf32> -> vector<16x16xf32>
    %cst_3 = arith.constant 0.176776692 : f32
    %9 = vector.broadcast %cst_3 : f32 to vector<16x16xf32>
    %10 = arith.mulf %8, %9 : vector<16x16xf32>
    %c0_4 = arith.constant 0 : index
    %c0_5 = arith.constant 0 : index
    %11 = vector.load %arg1[%c0_4, %c0_5] : memref<16x1xi32, #tpu.memory_space<vmem>>, vector<16x1xi32>
    %c0_6 = arith.constant 0 : index
    %c0_7 = arith.constant 0 : index
    %12 = vector.load %arg2[%c0_6, %c0_7] : memref<1x16xi32, #tpu.memory_space<vmem>>, vector<1x16xi32>
    %13 = vector.broadcast %11 : vector<16x1xi32> to vector<16x16xi32>
    %14 = vector.broadcast %12 : vector<1x16xi32> to vector<16x16xi32>
    %15 = arith.cmpi eq, %13, %14 : vector<16x16xi32>
    %cst_8 = arith.constant -1.000000e+30 : f32
    %16 = vector.broadcast %cst_8 : f32 to vector<16x16xf32>
    %17 = arith.select %15, %10, %16 : vector<16x16xi1>, vector<16x16xf32>
    %cst_9 = arith.constant dense<0xFF800000> : vector<16xf32>
    %18 = vector.multi_reduction <maximumf>, %17, %cst_9 [1] : vector<16x16xf32> to vector<16xf32>
    %19 = vector.shape_cast %18 : vector<16xf32> to vector<16x1xf32>
    %20 = vector.broadcast %19 : vector<16x1xf32> to vector<16x16xf32>
    %21 = arith.subf %10, %20 : vector<16x16xf32>
    %22 = math.exp %21 : vector<16x16xf32>
    %cst_10 = arith.constant 0.000000e+00 : f32
    %23 = vector.broadcast %cst_10 : f32 to vector<16x16xf32>
    %24 = arith.select %15, %22, %23 : vector<16x16xi1>, vector<16x16xf32>
    %cst_11 = arith.constant dense<0.000000e+00> : vector<16xf32>
    %25 = vector.multi_reduction <add>, %24, %cst_11 [1] : vector<16x16xf32> to vector<16xf32>
    %26 = vector.shape_cast %25 : vector<16xf32> to vector<16x1xf32>
    %27 = tpu.reciprocal %26 {approx = true} : vector<16x1xf32> -> vector<16x1xf32>
    %28 = vector.broadcast %27 : vector<16x1xf32> to vector<16x16xf32>
    %29 = arith.mulf %24, %28 : vector<16x16xf32>
    %cst_12 = arith.constant dense<0.000000e+00> : vector<16x128xf32>
    %30 = tpu.matmul %29, %7, %cst_12 {dimension_numbers = #tpu.dot_dimension_numbers<[1], [0], [0], [1], [0, 0, 1, 1], [], []>} : vector<16x16xf32>, vector<16x128xf32>, vector<16x128xf32> -> vector<16x128xf32>
    %c0_13 = arith.constant 0 : index
    %c0_14 = arith.constant 0 : index
    %31 = vector.load %arg5[%c0_13, %c0_14] : memref<8x128xf32, #tpu.memory_space<vmem>>, vector<8x128xf32>
    %c0_15 = arith.constant 0 : index
    %c0_16 = arith.constant 0 : index
    %32 = vector.load %arg4[%c0_15, %c0_16] : memref<8x16xf32, #tpu.memory_space<vmem>>, vector<8x16xf32>
    %cst_17 = arith.constant dense<0.000000e+00> : vector<8x128xf32>
    %33 = tpu.matmul %32, %30, %cst_17 {dimension_numbers = #tpu.dot_dimension_numbers<[1], [0], [0], [1], [0, 0, 1, 1], [], []>} : vector<8x16xf32>, vector<16x128xf32>, vector<8x128xf32> -> vector<8x128xf32>
    %34 = arith.addf %31, %33 : vector<8x128xf32>
    %c0_18 = arith.constant 0 : index
    %c0_19 = arith.constant 0 : index
    %35 = vector.load %arg5[%c0_18, %c0_19] : memref<8x128xf32, #tpu.memory_space<vmem>>, vector<8x128xf32>
    tpu.vector_store %arg5[%c0_18, %c0_19], %34 {strides = array<i32>} : memref<8x128xf32, #tpu.memory_space<vmem>>, vector<8x128xf32>,
    return
  }
  func.func @transform_0(%arg0: i32) -> (i32, i32) {
    %c0_i32 = arith.constant 0 : i32
    %c0_i32_0 = arith.constant 0 : i32
    return %arg0, %c0_i32 : i32, i32
  }
  func.func @transform_1(%arg0: i32) -> (i32, i32) {
    %c0_i32 = arith.constant 0 : i32
    %c0_i32_0 = arith.constant 0 : i32
    %c0_i32_1 = arith.constant 0 : i32
    return %c0_i32, %c0_i32_0 : i32, i32
  }
  func.func @transform_2(%arg0: i32) -> (i32, i32) {
    %c0_i32 = arith.constant 0 : i32
    %c0_i32_0 = arith.constant 0 : i32
    %c0_i32_1 = arith.constant 0 : i32
    return %c0_i32, %c0_i32_0 : i32, i32
  }
  func.func @transform_3(%arg0: i32) -> (i32, i32) {
    %c0_i32 = arith.constant 0 : i32
    %c0_i32_0 = arith.constant 0 : i32
    return %c0_i32, %arg0 : i32, i32
  }
  func.func @transform_4(%arg0: i32) -> (i32, i32) {
    %c0_i32 = arith.constant 0 : i32
    %c0_i32_0 = arith.constant 0 : i32
    %c0_i32_1 = arith.constant 0 : i32
    return %c0_i32, %c0_i32_0 : i32, i32
  }
}

</mosaic_0001>

<llo_original>
// kernel: tpu_custom_call.1
$region0: #{tpu_custom_call.1}
  #allocation0 [shape = 'u32[]', space=smem, size = 0x4, offset = 0x4, fixed_abs, tag = 'smem constant byte address 0x4 - core index']
  #allocation1 [shape = 'u32[144,128]{1,0:T(1,128)}', space=vmem, size = 0x12000, scoped, tag = 'internal scratch']
  %s0 = inlined_call_operand.vmem [shape: s32[16,1], index: 0, kind: input, shape index: {}]
  %s1 = inlined_call_operand.hbm [shape: s32[1,16], index: 1, kind: input, shape index: {}]
  %s2 = inlined_call_operand.vmem [shape: f32[16,128], index: 2, kind: input, shape index: {}]
  %s3 = inlined_call_operand.vmem [shape: f32[8,16], index: 3, kind: input, shape index: {}]
  %s4 = inlined_call_operand.hbm [shape: f32[8,128], index: 4, kind: output, shape index: {}]
  %s5 = sld [smem:[#allocation0]]
  $region34: #{tpu_custom_call.1} parent=0
    _
  %s7 = ssub.s32 1, %s5
  %s8 = scalar_select 0, %s7, %s5
  $region1: #{tpu_custom_call.1} parent=0
    #allocation2 [shape = 'u8[512]{0}', space=vmem, size = 0x400, scoped, tag = 'input window, operand 1, single buffered']
    #allocation3 [shape = 's32[1]{0}', space=sflag, size = 0x4, scoped, tag = 'scoped memory for tpu_custom_call.1']
    #allocation4 [shape = 's32[1]{0}', space=sflag, size = 0x4, scoped, tag = 'scoped memory for tpu_custom_call.1']
    #allocation5 [shape = 'u8[4096]{0}', space=vmem, size = 0x1000, scoped, tag = 'output window, operand 0, single buffered']
    %9 = vsyncpa [#allocation3], 0
    %10 = vsyncpa [#allocation4], 0
    // Predicated region
    $region2: #{tpu_custom_call.1} parent=1 // pred_check
      _
    $region3: #{tpu_custom_call.1} parent=1 // pred_check_branch
      %12 = sbr.rel (0) target = $region5
    $region4: #{tpu_custom_call.1} parent=1 // pred_region
      _
    $region5: #{tpu_custom_call.1} parent=1 // pred_fallthru
      _
    // Predicated region
    $region6: #{tpu_custom_call.1} parent=1 // pred_check
      _
    $region7: #{tpu_custom_call.1} parent=1 // pred_check_branch
      %14 = sbr.rel (0) target = $region9
    $region8: #{tpu_custom_call.1} parent=1 // pred_region
      %s16 = ssub.s32 16, 16
      %17 = vsyncadd [#allocation3], %s16
      %s19 = sshll.u32 [#allocation2], 4
      %s20 = int_to_ptr.vmem [resolvable:$true] %s19
      %22 = dma.hbm_to_vmem [thread:$0]  %s1, 16, %s20, [#allocation3]
    $region9: #{tpu_custom_call.1} parent=1 // pred_fallthru
      _
    // Predicated region
    $region10: #{tpu_custom_call.1} parent=1 // pred_check
      _
    $region11: #{tpu_custom_call.1} parent=1 // pred_check_branch
      %24 = sbr.rel (0) target = $region13
    $region12: #{tpu_custom_call.1} parent=1 // pred_region
      _
    $region13: #{tpu_custom_call.1} parent=1 // pred_fallthru
      _
    // Predicated region
    $region14: #{tpu_custom_call.1} parent=1 // pred_check
      _
    $region15: #{tpu_custom_call.1} parent=1 // pred_check_branch
      %26 = sbr.rel (0) target = $region17
    $region16: #{tpu_custom_call.1} parent=1 // pred_region
      _
    $region17: #{tpu_custom_call.1} parent=1 // pred_fallthru
      _
    // Predicated region
    $region18: #{tpu_custom_call.1} parent=1 // pred_check
      _
    $region19: #{tpu_custom_call.1} parent=1 // pred_check_branch
      %28 = sbr.rel (0) target = $region21
    $region20: #{tpu_custom_call.1} parent=1 // pred_region
      %29 = dma.done [#allocation3], 16
    $region21: #{tpu_custom_call.1} parent=1 // pred_fallthru
      _
    %p30 = scmp.eq.s32.totalorder 0, 0
    // Predicated region
    $region22: #{tpu_custom_call.1} parent=1 // pred_check
      %p31 = pneg %p30
    $region23: #{tpu_custom_call.1} parent=1 // pred_check_branch
      %33 = sbr.rel (%p31) target = $region25
    $region24: #{tpu_custom_call.1} parent=1 // pred_region
      %34 = vst [vmem:[#allocation5] sm:$0xff] 0.0
    $region25: #{tpu_custom_call.1} parent=1 // pred_fallthru
      _
    %s35 = smul.u32 0, 16
    %s36 = scalar_lea.vmem %s2, %s35
    %v37 = vld [vmem:[%s36] sm:$0xff]
    %v38 = vld [vmem:[%s36 + $0x8] sm:$0xff]
    %v39 = vld [vmem:[%s2] sm:$0xff]
    %v40 = vld [vmem:[%s2 + $0x8] sm:$0xff]
    %41 = vmatprep.subr.mxu0 0.0
    %42 = vmatpush1.xpose.msra.mxu0 %v39
    %43 = vmatprep.subr.mxu0 0.0
    %44 = vmatpush1.xpose.msra.mxu0 %v40
    %45 = vmatprep.subr.mxu0 0.0
    %46 = vmatpush1.xpose.msra.mxu0 0.0
    %47 = vmatprep.subr.mxu0 0.0
    %48 = vmatpush1.xpose.msra.mxu0 0.0
    %49 = vmatprep.subr.mxu0 0.0
    %50 = vmatpush1.xpose.msra.mxu0 0.0
    %51 = vmatprep.subr.mxu0 0.0
    %52 = vmatpush1.xpose.msra.mxu0 0.0
    %53 = vmatprep.subr.mxu0 0.0
    %54 = vmatpush1.xpose.msra.mxu0 0.0
    %55 = vmatprep.subr.mxu0 0.0
    %56 = vmatpush1.xpose.msra.mxu0 0.0
    %57 = vmatprep.subr.mxu0 0.0
    %58 = vmatpush1.xpose.msra.mxu0 0.0
    %59 = vmatprep.subr.mxu0 0.0
    %60 = vmatpush1.xpose.msra.mxu0 0.0
    %61 = vmatprep.subr.mxu0 0.0
    %62 = vmatpush1.xpose.msra.mxu0 0.0
    %63 = vmatprep.subr.mxu0 0.0
    %64 = vmatpush1.xpose.msra.mxu0 0.0
    %65 = vmatprep.subr.mxu0 0.0
    %66 = vmatpush1.xpose.msra.mxu0 0.0
    %67 = vmatprep.subr.mxu0 0.0
    %68 = vmatpush1.xpose.msra.mxu0 0.0
    %69 = vmatprep.subr.mxu0 0.0
    %70 = vmatpush1.xpose.msra.mxu0 0.0
    %71 = vmatprep.subr.mxu0 0.0
    %72 = vmatpush1.xpose.msra.mxu0 0.0
    %73 = vmatprep.subr.mxu0 0.0
    %74 = vmatpush1.xpose.msra.mxu0 0.0
    %75 = vmatprep.subr.mxu0 0.0
    %76 = vmatpush1.xpose.msra.mxu0 0.0
    %77 = vmatprep.subr.mxu0 0.0
    %78 = vmatpush1.xpose.msra.mxu0 0.0
    %79 = vmatprep.subr.mxu0 0.0
    %80 = vmatpush1.xpose.msra.mxu0 0.0
    %81 = vmatprep.subr.mxu0 0.0
    %82 = vmatpush1.xpose.msra.mxu0 0.0
    %83 = vmatprep.subr.mxu0 0.0
    %84 = vmatpush1.xpose.msra.mxu0 0.0
    %85 = vmatprep.subr.mxu0 0.0
    %86 = vmatpush1.xpose.msra.mxu0 0.0
    %87 = vmatprep.subr.mxu0 0.0
    %88 = vmatpush1.xpose.msra.mxu0 0.0
    %89 = vmatprep.subr.mxu0 0.0
    %90 = vmatpush1.xpose.msra.mxu0 0.0
    %91 = vmatprep.subr.mxu0 0.0
    %92 = vmatpush1.xpose.msra.mxu0 0.0
    %93 = vmatprep.subr.mxu0 0.0
    %94 = vmatpush1.xpose.msra.mxu0 0.0
    %95 = vmatprep.subr.mxu0 0.0
    %96 = vmatpush1.xpose.msra.mxu0 0.0
    %97 = vmatprep.subr.mxu0 0.0
    %98 = vmatpush1.xpose.msra.mxu0 0.0
    %99 = vmatprep.subr.mxu0 0.0
    %100 = vmatpush1.xpose.msra.mxu0 0.0
    %101 = vmatprep.subr.mxu0 0.0
    %102 = vmatpush1.xpose.msra.mxu0 0.0
    %103 = vmatprep.subr.mxu0 0.0
    %104 = vmatpush1.xpose.msra.mxu0 0.0
    %105 = vmatprep.mubr.f32.mxu0 0.0
    %106 = vmatmul.mubr.f32.gmra.mrb[0].mxu0 %v37
    %v107 = vpop.f32.mrb[0].mxu0
    %v108 = vadd.f32 0.0, %v107
    %v109 = vpop.f32.mrb[0].mxu0
    %110 = vmatprep.mubr.f32.mxu0 0.0
    %111 = vmatmul.mubr.f32.gmra.mrb[0].mxu0 %v38
    %v112 = vpop.f32.mrb[0].mxu0
    %v113 = vadd.f32 0.0, %v112
    %v114 = vpop.f32.mrb[0].mxu0
    %115 = vdwg.mxu0
    %v116 = vmul.f32 %v108, 0.17677669
    %v117 = vmul.f32 %v113, 0.17677669
    %v118 = vld [vmem:[%s0] sm:$0xff]
    %v119 = vld [vmem:[%s0 + $0x8] sm:$0xff]
    %v120 = vld [vmem:[#allocation2] sm:$0x1]
    %121 = vset.pattern.permute.xlu0 0
    %122 = vperm.xlu0 %121, %v118
    %v123 = vpop.permute.xlu0 %122
    %124 = vset.pattern.permute.xlu0 0
    %125 = vperm.xlu0 %124, %v119
    %v126 = vpop.permute.xlu0 %125
    %v127 = vlaneseq
    %v128 = vshrl.u32 %v127, 7
    %v129 = vsub.s32 0, %v128
    %v130 = vrot.slane %v120, %v129
    %vm131 = vcmp.eq.s32.totalorder %v123, %v130
    %vm132 = vcmp.eq.s32.totalorder %v126, %v130
    %v133 = vsel %vm131, %v116, -1e+30
    %v134 = vsel %vm132, %v117, -1e+30
    %vm135 = vcmask 130048
    %v136 = vsel %vm135, %v133, -inf
    %137 = vmax.xlane.f32.xlu0 %v136
    %v138 = vpop.xlane.xlu0 %137
    %v139 = vsel %vm135, %v134, -inf
    %140 = vmax.xlane.f32.xlu0 %v139
    %v141 = vpop.xlane.xlu0 %140
    %v142 = vsub.f32 %v116, %v138
    %v143 = vsub.f32 %v117, %v141
    %v144 = vmul.f32 %v142, 1.442695
    %v145 = vpow.pop %v144
    %v146 = vmul.f32 %v143, 1.442695
    %v147 = vpow.pop %v146
    %v148 = vsel %vm131, %v145, 0.0
    %v149 = vsel %vm132, %v147, 0.0
    %v150 = vsel %vm135, %v148, 0.0
    %151 = vadd.xlane.f32.xlu0 %v150
    %v152 = vpop.xlane.xlu0 %151
    %v153 = vsel %vm135, %v149, 0.0
    %154 = vadd.xlane.f32.xlu0 %v153
    %v155 = vpop.xlane.xlu0 %154
    %v156 = vrcp.pop %v152
    %v157 = vrcp.pop %v155
    %v158 = vmul.f32 %v148, %v156
    %v159 = vmul.f32 %v149, %v157
    %v161 = vsel %vm135, %v158, 0
    %v164 = vsel %vm135, %v159, 0
    %166 = vmatprep.subr.mxu0 0.0
    %167 = vmatpush1.msra.mxu0 %v39
    %168 = vmatprep.subr.mxu0 0.0
    %169 = vmatpush1.msra.mxu0 %v40
    %170 = vmatprep.subr.mxu0 0.0
    %171 = vmatpush1.msra.mxu0 0.0
    %172 = vmatprep.subr.mxu0 0.0
    %173 = vmatpush1.msra.mxu0 0.0
    %174 = vmatprep.subr.mxu0 0.0
    %175 = vmatpush1.msra.mxu0 0.0
    %176 = vmatprep.subr.mxu0 0.0
    %177 = vmatpush1.msra.mxu0 0.0
    %178 = vmatprep.subr.mxu0 0.0
    %179 = vmatpush1.msra.mxu0 0.0
    %180 = vmatprep.subr.mxu0 0.0
    %181 = vmatpush1.msra.mxu0 0.0
    %182 = vmatprep.subr.mxu0 0.0
    %183 = vmatpush1.msra.mxu0 0.0
    %184 = vmatprep.subr.mxu0 0.0
    %185 = vmatpush1.msra.mxu0 0.0
    %186 = vmatprep.subr.mxu0 0.0
    %187 = vmatpush1.msra.mxu0 0.0
    %188 = vmatprep.subr.mxu0 0.0
    %189 = vmatpush1.msra.mxu0 0.0
    %190 = vmatprep.subr.mxu0 0.0
    %191 = vmatpush1.msra.mxu0 0.0
    %192 = vmatprep.subr.mxu0 0.0
    %193 = vmatpush1.msra.mxu0 0.0
    %194 = vmatprep.subr.mxu0 0.0
    %195 = vmatpush1.msra.mxu0 0.0
    %196 = vmatprep.subr.mxu0 0.0
    %197 = vmatpush1.msra.mxu0 0.0
    %198 = vmatprep.subr.mxu0 0.0
    %199 = vmatpush1.msra.mxu0 0.0
    %200 = vmatprep.subr.mxu0 0.0
    %201 = vmatpush1.msra.mxu0 0.0
    %202 = vmatprep.subr.mxu0 0.0
    %203 = vmatpush1.msra.mxu0 0.0
    %204 = vmatprep.subr.mxu0 0.0
    %205 = vmatpush1.msra.mxu0 0.0
    %206 = vmatprep.subr.mxu0 0.0
    %207 = vmatpush1.msra.mxu0 0.0
    %208 = vmatprep.subr.mxu0 0.0
    %209 = vmatpush1.msra.mxu0 0.0
    %210 = vmatprep.subr.mxu0 0.0
    %211 = vmatpush1.msra.mxu0 0.0
    %212 = vmatprep.subr.mxu0 0.0
    %213 = vmatpush1.msra.mxu0 0.0
    %214 = vmatprep.subr.mxu0 0.0
    %215 = vmatpush1.msra.mxu0 0.0
    %216 = vmatprep.subr.mxu0 0.0
    %217 = vmatpush1.msra.mxu0 0.0
    %218 = vmatprep.subr.mxu0 0.0
    %219 = vmatpush1.msra.mxu0 0.0
    %220 = vmatprep.subr.mxu0 0.0
    %221 = vmatpush1.msra.mxu0 0.0
    %222 = vmatprep.subr.mxu0 0.0
    %223 = vmatpush1.msra.mxu0 0.0
    %224 = vmatprep.subr.mxu0 0.0
    %225 = vmatpush1.msra.mxu0 0.0
    %226 = vmatprep.subr.mxu0 0.0
    %227 = vmatpush1.msra.mxu0 0.0
    %228 = vmatprep.subr.mxu0 0.0
    %229 = vmatpush1.msra.mxu0 0.0
    %230 = vmatprep.mubr.f32.mxu0 0.0
    %231 = vmatmul.mubr.f32.gmra.mrb[0].mxu0 %v161
    %v232 = vpop.f32.mrb[0].mxu0
    %v233 = vadd.f32 0.0, %v232
    %v234 = vpop.f32.mrb[0].mxu0
    %235 = vmatprep.mubr.f32.mxu0 0.0
    %236 = vmatmul.mubr.f32.gmra.mrb[0].mxu0 %v164
    %v237 = vpop.f32.mrb[0].mxu0
    %v238 = vadd.f32 0.0, %v237
    %v239 = vpop.f32.mrb[0].mxu0
    %240 = vdwg.mxu0
    %v241 = vld [vmem:[#allocation5] sm:$0xff]
    %v242 = vld [vmem:[%s3] sm:$0xff]
    %v244 = vsel %vm135, %v242, 0
    %246 = vmatprep.subr.mxu0 0.0
    %247 = vmatpush1.msra.mxu0 %v233
    %248 = vmatprep.subr.mxu0 0.0
    %249 = vmatpush1.msra.mxu0 %v238
    %250 = vmatprep.subr.mxu0 0.0
    %251 = vmatpush1.msra.mxu0 0.0
    %252 = vmatprep.subr.mxu0 0.0
    %253 = vmatpush1.msra.mxu0 0.0
    %254 = vmatprep.subr.mxu0 0.0
    %255 = vmatpush1.msra.mxu0 0.0
    %256 = vmatprep.subr.mxu0 0.0
    %257 = vmatpush1.msra.mxu0 0.0
    %258 = vmatprep.subr.mxu0 0.0
    %259 = vmatpush1.msra.mxu0 0.0
    %260 = vmatprep.subr.mxu0 0.0
    %261 = vmatpush1.msra.mxu0 0.0
    %262 = vmatprep.subr.mxu0 0.0
    %263 = vmatpush1.msra.mxu0 0.0
    %264 = vmatprep.subr.mxu0 0.0
    %265 = vmatpush1.msra.mxu0 0.0
    %266 = vmatprep.subr.mxu0 0.0
    %267 = vmatpush1.msra.mxu0 0.0
    %268 = vmatprep.subr.mxu0 0.0
    %269 = vmatpush1.msra.mxu0 0.0
    %270 = vmatprep.subr.mxu0 0.0
    %271 = vmatpush1.msra.mxu0 0.0
    %272 = vmatprep.subr.mxu0 0.0
    %273 = vmatpush1.msra.mxu0 0.0
    %274 = vmatprep.subr.mxu0 0.0
    %275 = vmatpush1.msra.mxu0 0.0
    %276 = vmatprep.subr.mxu0 0.0
    %277 = vmatpush1.msra.mxu0 0.0
    %278 = vmatprep.subr.mxu0 0.0
    %279 = vmatpush1.msra.mxu0 0.0
    %280 = vmatprep.subr.mxu0 0.0
    %281 = vmatpush1.msra.mxu0 0.0
    %282 = vmatprep.subr.mxu0 0.0
    %283 = vmatpush1.msra.mxu0 0.0
    %284 = vmatprep.subr.mxu0 0.0
    %285 = vmatpush1.msra.mxu0 0.0
    %286 = vmatprep.subr.mxu0 0.0
    %287 = vmatpush1.msra.mxu0 0.0
    %288 = vmatprep.subr.mxu0 0.0
    %289 = vmatpush1.msra.mxu0 0.0
    %290 = vmatprep.subr.mxu0 0.0
    %291 = vmatpush1.msra.mxu0 0.0
    %292 = vmatprep.subr.mxu0 0.0
    %293 = vmatpush1.msra.mxu0 0.0
    %294 = vmatprep.subr.mxu0 0.0
    %295 = vmatpush1.msra.mxu0 0.0
    %296 = vmatprep.subr.mxu0 0.0
    %297 = vmatpush1.msra.mxu0 0.0
    %298 = vmatprep.subr.mxu0 0.0
    %299 = vmatpush1.msra.mxu0 0.0
    %300 = vmatprep.subr.mxu0 0.0
    %301 = vmatpush1.msra.mxu0 0.0
    %302 = vmatprep.subr.mxu0 0.0
    %303 = vmatpush1.msra.mxu0 0.0
    %304 = vmatprep.subr.mxu0 0.0
    %305 = vmatpush1.msra.mxu0 0.0
    %306 = vmatprep.subr.mxu0 0.0
    %307 = vmatpush1.msra.mxu0 0.0
    %308 = vmatprep.subr.mxu0 0.0
    %309 = vmatpush1.msra.mxu0 0.0
    %310 = vmatprep.mubr.f32.mxu0 0.0
    %311 = vmatmul.mubr.f32.gmra.mrb[0].mxu0 %v244
    %v312 = vpop.f32.mrb[0].mxu0
    %v313 = vadd.f32 0.0, %v312
    %v314 = vpop.f32.mrb[0].mxu0
    %315 = vdwg.mxu0
    %v316 = vadd.f32 %v241, %v313
    %317 = vst [vmem:[#allocation5] sm:$0xff] %v316
    // Predicated region
    $region26: #{tpu_custom_call.1} parent=1 // pred_check
      _
    $region27: #{tpu_custom_call.1} parent=1 // pred_check_branch
      %319 = sbr.rel (0) target = $region29
    $region28: #{tpu_custom_call.1} parent=1 // pred_region
      %s321 = ssub.s32 128, 128
      %322 = vsyncadd [#allocation4], %s321
      %s324 = sshll.u32 [#allocation5], 4
      %s325 = int_to_ptr.vmem [resolvable:$true] %s324
      %327 = dma.vmem_to_hbm [thread:$0]  %s325, 128, %s4, [#allocation4]
    $region29: #{tpu_custom_call.1} parent=1 // pred_fallthru
      _
    // Predicated region
    $region30: #{tpu_custom_call.1} parent=1 // pred_check
      _
    $region31: #{tpu_custom_call.1} parent=1 // pred_check_branch
      %329 = sbr.rel (0) target = $region33
    $region32: #{tpu_custom_call.1} parent=1 // pred_region
      %330 = dma.done [#allocation4], 128
    $region33: #{tpu_custom_call.1} parent=1 // pred_fallthru
      _
    %331 = vsyncpa [#allocation3], 1
    %332 = vsyncpa [#allocation4], 1

</llo_original>
